<compile_context>
chip_gen: v7x
topology: tpu7x:2x2x1
jax: 0.10.0
libtpu: 0.0.40
codegen_flags: <defaults>
</compile_context>

<pallas_src>
from dataclasses import dataclass

import jax
import jax.numpy as jnp
from jax import lax
from jax.experimental import pallas as pl
from jax.experimental.pallas import tpu as pltpu


# ----------------------------------------------------------------------------
# helpers
# ----------------------------------------------------------------------------

def _round_up(x, m):
    return (x + m - 1) // m * m


def _row_tile(n, d):
    """Row-tile size: multiple of 128 (or single full tile), ~<=2 MiB f32."""
    n8 = _round_up(max(n, 1), 8)
    budget = max(128, ((2 * 1024 * 1024) // (4 * max(d, 1))) // 128 * 128)
    tn = min(512, budget)
    if n8 <= tn:
        return n8          # single tile: block dims == padded array dims
    return tn              # multi-tile: tn is a multiple of 128


# ----------------------------------------------------------------------------
# GraphNorm kernels
# ----------------------------------------------------------------------------

def _graphnorm_stats_kernel(bidx_ref, x_ref, sum_out, sq_out, acc_sum, acc_sq):
    """Accumulate per-graph sum(x) and sum(x^2) across row tiles."""
    i = pl.program_id(0)

    @pl.when(i == 0)
    def _():
        acc_sum[...] = jnp.zeros_like(acc_sum)
        acc_sq[...] = jnp.zeros_like(acc_sq)

    x = x_ref[...]                                   # [TN, D]
    bidx = bidx_ref[...]                             # [1, TN] int32
    B = acc_sum.shape[0]
    tn = x.shape[0]
    # one-hot graph assignment for this tile (padded rows have bidx == B -> 0)
    onehot = (bidx == lax.broadcasted_iota(jnp.int32, (B, tn), 0)
              ).astype(jnp.float32)                  # [B, TN]

    acc_sum[...] += jnp.dot(onehot, x, preferred_element_type=jnp.float32)
    acc_sq[...] += jnp.dot(onehot, x * x, preferred_element_type=jnp.float32)

    @pl.when(i == pl.num_programs(0) - 1)
    def _():
        sum_out[...] = acc_sum[...]
        sq_out[...] = acc_sq[...]


def _graphnorm_norm_kernel(bidx_ref, x_ref, sum_ref, sq_ref, inv_cnt_ref,
                           w_ref, b_ref, ms_ref, o_ref):
    """Normalize one row tile using the per-graph moments."""
    x = x_ref[...]                                   # [TN, D]
    bidx = bidx_ref[...]                             # [1, TN]
    B = sum_ref.shape[0]
    tn = x.shape[0]
    onehot = (bidx == lax.broadcasted_iota(jnp.int32, (B, tn), 0)
              ).astype(jnp.float32)                  # [B, TN]

    inv_cnt = inv_cnt_ref[...]                       # [B, 1]
    ms = ms_ref[...]                                 # [1, D]
    mean = sum_ref[...] * inv_cnt                    # [B, D]
    ex2 = sq_ref[...] * inv_cnt                      # [B, D]
    # E[(x - ms*mean)^2] = E[x^2] - mean^2 * ms * (2 - ms)
    var_sub = jnp.maximum(ex2 - mean * mean * (ms * (2.0 - ms)), 0.0)
    inv_std = lax.rsqrt(var_sub + 1e-6)              # [B, D]  (tiny rsqrt)

    # broadcast per-graph stats back to this tile's nodes (contract B axis)
    dn = (((0,), (0,)), ((), ()))
    mean_n = lax.dot_general(onehot, mean, dn,
                             preferred_element_type=jnp.float32)   # [TN, D]
    istd_n = lax.dot_general(onehot, inv_std, dn,
                             preferred_element_type=jnp.float32)   # [TN, D]

    sub = x - mean_n * ms
    o_ref[...] = w_ref[...] * sub * istd_n + b_ref[...]


# ----------------------------------------------------------------------------
# LayerNorm kernel
# ----------------------------------------------------------------------------

def _layernorm_kernel(x_ref, w_ref, b_ref, o_ref):
    x = x_ref[...]
    mean = jnp.mean(x, axis=-1, keepdims=True)
    var = jnp.mean(jnp.square(x - mean), axis=-1, keepdims=True)
    o_ref[...] = (x - mean) * lax.rsqrt(var + 1e-5) * w_ref[...] + b_ref[...]


# ----------------------------------------------------------------------------
# BatchNorm (training-mode forward) kernels
# ----------------------------------------------------------------------------

def _batchnorm_stats_kernel(x_ref, sum_out, sq_out, acc_sum, acc_sq):
    i = pl.program_id(0)

    @pl.when(i == 0)
    def _():
        acc_sum[...] = jnp.zeros_like(acc_sum)
        acc_sq[...] = jnp.zeros_like(acc_sq)

    x = x_ref[...]
    acc_sum[...] += jnp.sum(x, axis=0, keepdims=True)
    acc_sq[...] += jnp.sum(x * x, axis=0, keepdims=True)

    @pl.when(i == pl.num_programs(0) - 1)
    def _():
        sum_out[...] = acc_sum[...]
        sq_out[...] = acc_sq[...]


def _batchnorm_norm_kernel(x_ref, sum_ref, sq_ref, inv_n_ref, w_ref, b_ref,
                           o_ref):
    inv_n = inv_n_ref[...]                           # [1, 1]
    mean = sum_ref[...] * inv_n                      # [1, D]
    var = jnp.maximum(sq_ref[...] * inv_n - mean * mean, 0.0)
    scale = lax.rsqrt(var + 1e-5) * w_ref[...]       # [1, D]
    o_ref[...] = (x_ref[...] - mean) * scale + b_ref[...]


# ----------------------------------------------------------------------------
# JAX wrapper (parameter setup, padding/tiling glue, pallas_call)
# ----------------------------------------------------------------------------

@dataclass
class Graph:
    batch_num_nodes: tuple  # nodes per graph


class NormLayer:
    def __init__(self, hidden_dim, norm_type):
        if norm_type not in ("batchnorm", "layernorm", "graphnorm"):
            raise NotImplementedError(norm_type)
        self.hidden_dim = hidden_dim
        self.norm_type = norm_type
        # PyTorch default affine init: weight=1, bias=0 (and mean_scale=1).
        self.weight = jnp.ones((hidden_dim,), jnp.float32)
        self.bias = jnp.zeros((hidden_dim,), jnp.float32)
        if norm_type == "graphnorm":
            self.mean_scale = jnp.ones((hidden_dim,), jnp.float32)

    # ------------------------------------------------------------------
    def __call__(self, graph, x):
        assert x.shape[-1] == self.hidden_dim
        if self.norm_type == "layernorm":
            return self._layernorm(x)
        if self.norm_type == "batchnorm":
            return self._batchnorm(x)
        return self._graphnorm(graph, x)

    # ------------------------------------------------------------------
    def _layernorm(self, x):
        N, D = x.shape
        tn = _row_tile(N, D)
        n_pad = _round_up(N, tn)
        xp = jnp.pad(x, ((0, n_pad - N), (0, 0)))
        x_spec = pl.BlockSpec((tn, D), lambda i: (i, 0))
        d_spec = pl.BlockSpec((1, D), lambda i: (0, 0))
        out = pl.pallas_call(
            _layernorm_kernel,
            out_shape=jax.ShapeDtypeStruct((n_pad, D), jnp.float32),
            grid=(n_pad // tn,),
            in_specs=[x_spec, d_spec, d_spec],
            out_specs=x_spec,
            compiler_params=pltpu.CompilerParams(
                dimension_semantics=("parallel",)),
        )(xp, self.weight.reshape(1, D), self.bias.reshape(1, D))
        return out[:N]

    # ------------------------------------------------------------------
    def _batchnorm(self, x):
        N, D = x.shape
        tn = _row_tile(N, D)
        n_pad = _round_up(N, tn)
        xp = jnp.pad(x, ((0, n_pad - N), (0, 0)))
        grid = (n_pad // tn,)
        x_spec = pl.BlockSpec((tn, D), lambda i: (i, 0))
        d_spec = pl.BlockSpec((1, D), lambda i: (0, 0))

        s, sq = pl.pallas_call(
            _batchnorm_stats_kernel,
            out_shape=(jax.ShapeDtypeStruct((1, D), jnp.float32),
                       jax.ShapeDtypeStruct((1, D), jnp.float32)),
            grid=grid,
            in_specs=[x_spec],
            out_specs=(d_spec, d_spec),
            scratch_shapes=[pltpu.VMEM((1, D), jnp.float32),
                            pltpu.VMEM((1, D), jnp.float32)],
            compiler_params=pltpu.CompilerParams(
                dimension_semantics=("arbitrary",)),
        )(xp)

        inv_n = jnp.full((1, 1), 1.0 / N, jnp.float32)
        out = pl.pallas_call(
            _batchnorm_norm_kernel,
            out_shape=jax.ShapeDtypeStruct((n_pad, D), jnp.float32),
            grid=grid,
            in_specs=[x_spec, d_spec, d_spec,
                      pl.BlockSpec((1, 1), lambda i: (0, 0)),
                      d_spec, d_spec],
            out_specs=x_spec,
            compiler_params=pltpu.CompilerParams(
                dimension_semantics=("parallel",)),
        )(xp, s, sq, inv_n, self.weight.reshape(1, D),
          self.bias.reshape(1, D))
        return out[:N]

    # ------------------------------------------------------------------
    def _graphnorm(self, graph, x):
        N, D = x.shape
        counts = jnp.asarray(graph.batch_num_nodes, jnp.int32)       # [B]
        B = int(counts.shape[0])
        tn = _row_tile(N, D)
        n_pad = _round_up(N, tn)
        grid = (n_pad // tn,)

        # node -> graph index; padded rows get id B (matches no graph).
        bidx = jnp.repeat(jnp.arange(B, dtype=jnp.int32), counts,
                          total_repeat_length=N)
        bidx = jnp.pad(bidx, (0, n_pad - N), constant_values=B).reshape(1, n_pad)
        xp = jnp.pad(x, ((0, n_pad - N), (0, 0)))

        inv_cnt = (1.0 / jnp.maximum(counts, 1).astype(jnp.float32)
                   ).reshape(B, 1)
        w2 = self.weight.reshape(1, D)
        b2 = self.bias.reshape(1, D)
        ms2 = self.mean_scale.reshape(1, D)

        bidx_spec = pl.BlockSpec((1, tn), lambda i: (0, i))
        x_spec = pl.BlockSpec((tn, D), lambda i: (i, 0))
        bd_spec = pl.BlockSpec((B, D), lambda i: (0, 0))
        d_spec = pl.BlockSpec((1, D), lambda i: (0, 0))

        # pass 1: per-graph sum / sum-of-squares
        seg_sum, seg_sq = pl.pallas_call(
            _graphnorm_stats_kernel,
            out_shape=(jax.ShapeDtypeStruct((B, D), jnp.float32),
                       jax.ShapeDtypeStruct((B, D), jnp.float32)),
            grid=grid,
            in_specs=[bidx_spec, x_spec],
            out_specs=(bd_spec, bd_spec),
            scratch_shapes=[pltpu.VMEM((B, D), jnp.float32),
                            pltpu.VMEM((B, D), jnp.float32)],
            compiler_params=pltpu.CompilerParams(
                dimension_semantics=("arbitrary",)),
        )(bidx, xp)

        # pass 2: normalize
        out = pl.pallas_call(
            _graphnorm_norm_kernel,
            out_shape=jax.ShapeDtypeStruct((n_pad, D), jnp.float32),
            grid=grid,
            in_specs=[bidx_spec, x_spec, bd_spec, bd_spec,
                      pl.BlockSpec((B, 1), lambda i: (0, 0)),
                      d_spec, d_spec, d_spec],
            out_specs=x_spec,
            compiler_params=pltpu.CompilerParams(
                dimension_semantics=("parallel",)),
        )(bidx, xp, seg_sum, seg_sq, inv_cnt, w2, b2, ms2)
        return out[:N]


# ----------------------------------------------------------------------------
# Pure-JAX references (sanity checks only)
# ----------------------------------------------------------------------------

def _graphnorm_ref(layer, graph, x):
    counts = jnp.asarray(graph.batch_num_nodes, jnp.int32)
    B = counts.shape[0]
    N = x.shape[0]
    idx = jnp.repeat(jnp.arange(B), counts, total_repeat_length=N)
    seg_sum = jax.ops.segment_sum(x, idx, num_segments=B)
    mean = seg_sum / counts[:, None].astype(jnp.float32)
    sub = x - mean[idx] * layer.mean_scale
    seg_sq = jax.ops.segment_sum(sub ** 2, idx, num_segments=B)
    std = jnp.sqrt(seg_sq / counts[:, None].astype(jnp.float32) + 1e-6)
    return layer.weight * sub / std[idx] + layer.bias


def _layernorm_ref(layer, x):
    mean = x.mean(-1, keepdims=True)
    var = ((x - mean) ** 2).mean(-1, keepdims=True)
    return (x - mean) / jnp.sqrt(var + 1e-5) * layer.weight + layer.bias


def _batchnorm_ref(layer, x):
    mean = x.mean(0, keepdims=True)
    var = ((x - mean) ** 2).mean(0, keepdims=True)
    return (x - mean) / jnp.sqrt(var + 1e-5) * layer.weight + layer.bias


# ----------------------------------------------------------------------------

if __name__ == "__main__":
    key = jax.random.PRNGKey(0)

    hidden_dim = 32
    graph = Graph(batch_num_nodes=(5, 3))          # batch of 2 graphs, 8 nodes
    N = sum(graph.batch_num_nodes)
    x = jax.random.normal(key, (N, hidden_dim), jnp.float32)

    # main path: graphnorm
    gn = NormLayer(hidden_dim, "graphnorm")
    out_gn = jax.block_until_ready(gn(graph, x))
    assert jnp.allclose(out_gn, _graphnorm_ref(gn, graph, x),
                        atol=1e-4, rtol=1e-4), "graphnorm mismatch"

    # layernorm path
    ln = NormLayer(hidden_dim, "layernorm")
    out_ln = jax.block_until_ready(ln(graph, x))
    assert jnp.allclose(out_ln, _layernorm_ref(ln, x),
                        atol=1e-4, rtol=1e-4), "layernorm mismatch"

    # batchnorm path (training-mode forward)
    bn = NormLayer(hidden_dim, "batchnorm")
    out_bn = jax.block_until_ready(bn(graph, x))
    assert jnp.allclose(out_bn, _batchnorm_ref(bn, x),
                        atol=1e-4, rtol=1e-4), "batchnorm mismatch"

    print("KERNEL_OK")
</pallas_src>

<mosaic_0001>
module attributes {stable_mosaic.version = 11 : i64} {
  func.func @_graphnorm_stats_kernel(%arg0: i32, %arg1: memref<1x8xi32, #tpu.memory_space<vmem>>, %arg2: memref<8x32xf32, #tpu.memory_space<vmem>>, %arg3: memref<2x32xf32, #tpu.memory_space<vmem>>, %arg4: memref<2x32xf32, #tpu.memory_space<vmem>>, %arg5: memref<2x32xf32, #tpu.memory_space<vmem>>, %arg6: memref<2x32xf32, #tpu.memory_space<vmem>>) attributes {dimension_semantics = [#tpu.dimension_semantics<arbitrary>], iteration_bounds = array<i64: 1>, scalar_prefetch = 0 : i64, scratch_operands = 2 : i64, tpu.core_type = #tpu.core_type<tc>, window_params = [{transform_indices = @transform_0, window_bounds = array<i64: 1, 8>}, {transform_indices = @transform_1, window_bounds = array<i64: 8, 32>}, {pipeline_mode = #tpu.pipeline_mode<synchronous>, transform_indices = @transform_2, window_bounds = array<i64: 2, 32>}, {pipeline_mode = #tpu.pipeline_mode<synchronous>, transform_indices = @transform_3, window_bounds = array<i64: 2, 32>}]} {
    %c0_i32 = arith.constant 0 : i32
    %0 = arith.cmpi eq, %arg0, %c0_i32 : i32
    %1 = arith.extui %0 : i1 to i32
    %c0_i32_0 = arith.constant 0 : i32
    %2 = arith.cmpi ne, %1, %c0_i32_0 : i32
    scf.if %2 {
      %cst_15 = arith.constant 0.000000e+00 : f32
      %22 = vector.broadcast %cst_15 : f32 to vector<2x32xf32>
      %c0_16 = arith.constant 0 : index
      %c0_17 = arith.constant 0 : index
      %23 = vector.load %arg5[%c0_16, %c0_17] : memref<2x32xf32, #tpu.memory_space<vmem>>, vector<2x32xf32>
      tpu.vector_store %arg5[%c0_16, %c0_17], %22 {strides = array<i32>} : memref<2x32xf32, #tpu.memory_space<vmem>>, vector<2x32xf32>,
      %cst_18 = arith.constant 0.000000e+00 : f32
      %24 = vector.broadcast %cst_18 : f32 to vector<2x32xf32>
      %c0_19 = arith.constant 0 : index
      %c0_20 = arith.constant 0 : index
      %25 = vector.load %arg6[%c0_19, %c0_20] : memref<2x32xf32, #tpu.memory_space<vmem>>, vector<2x32xf32>
      tpu.vector_store %arg6[%c0_19, %c0_20], %24 {strides = array<i32>} : memref<2x32xf32, #tpu.memory_space<vmem>>, vector<2x32xf32>,
    } else {
    }
    %c0 = arith.constant 0 : index
    %c0_1 = arith.constant 0 : index
    %3 = vector.load %arg2[%c0, %c0_1] : memref<8x32xf32, #tpu.memory_space<vmem>>, vector<8x32xf32>
    %c0_2 = arith.constant 0 : index
    %c0_3 = arith.constant 0 : index
    %4 = vector.load %arg1[%c0_2, %c0_3] : memref<1x8xi32, #tpu.memory_space<vmem>>, vector<1x8xi32>
    %5 = tpu.iota {dimensions = array<i32: 0>} : vector<2x8xi32>
    %6 = vector.broadcast %4 : vector<1x8xi32> to vector<2x8xi32>
    %7 = arith.cmpi eq, %6, %5 : vector<2x8xi32>
    %8 = arith.extui %7 : vector<2x8xi1> to vector<2x8xi32>
    %9 = arith.sitofp %8 : vector<2x8xi32> to vector<2x8xf32>
    %c0_4 = arith.constant 0 : index
    %c0_5 = arith.constant 0 : index
    %10 = vector.load %arg5[%c0_4, %c0_5] : memref<2x32xf32, #tpu.memory_space<vmem>>, vector<2x32xf32>
    %cst = arith.constant dense<0.000000e+00> : vector<2x32xf32>
    %11 = tpu.matmul %9, %3, %cst {dimension_numbers = #tpu.dot_dimension_numbers<[1], [0], [0], [1], [0, 0, 1, 1], [], []>} : vector<2x8xf32>, vector<8x32xf32>, vector<2x32xf32> -> vector<2x32xf32>
    %12 = arith.addf %10, %11 : vector<2x32xf32>
    %c0_6 = arith.constant 0 : index
    %c0_7 = arith.constant 0 : index
    %13 = vector.load %arg5[%c0_6, %c0_7] : memref<2x32xf32, #tpu.memory_space<vmem>>, vector<2x32xf32>
    tpu.vector_store %arg5[%c0_6, %c0_7], %12 {strides = array<i32>} : memref<2x32xf32, #tpu.memory_space<vmem>>, vector<2x32xf32>,
    %c0_8 = arith.constant 0 : index
    %c0_9 = arith.constant 0 : index
    %14 = vector.load %arg6[%c0_8, %c0_9] : memref<2x32xf32, #tpu.memory_space<vmem>>, vector<2x32xf32>
    %15 = arith.mulf %3, %3 : vector<8x32xf32>
    %cst_10 = arith.constant dense<0.000000e+00> : vector<2x32xf32>
    %16 = tpu.matmul %9, %15, %cst_10 {dimension_numbers = #tpu.dot_dimension_numbers<[1], [0], [0], [1], [0, 0, 1, 1], [], []>} : vector<2x8xf32>, vector<8x32xf32>, vector<2x32xf32> -> vector<2x32xf32>
    %17 = arith.addf %14, %16 : vector<2x32xf32>
    %c0_11 = arith.constant 0 : index
    %c0_12 = arith.constant 0 : index
    %18 = vector.load %arg6[%c0_11, %c0_12] : memref<2x32xf32, #tpu.memory_space<vmem>>, vector<2x32xf32>
    tpu.vector_store %arg6[%c0_11, %c0_12], %17 {strides = array<i32>} : memref<2x32xf32, #tpu.memory_space<vmem>>, vector<2x32xf32>,
    %c0_i32_13 = arith.constant 0 : i32
    %19 = arith.cmpi eq, %arg0, %c0_i32_13 : i32
    %20 = arith.extui %19 : i1 to i32
    %c0_i32_14 = arith.constant 0 : i32
    %21 = arith.cmpi ne, %20, %c0_i32_14 : i32
    scf.if %21 {
      %c0_15 = arith.constant 0 : index
      %c0_16 = arith.constant 0 : index
      %22 = vector.load %arg5[%c0_15, %c0_16] : memref<2x32xf32, #tpu.memory_space<vmem>>, vector<2x32xf32>
      %c0_17 = arith.constant 0 : index
      %c0_18 = arith.constant 0 : index
      %23 = vector.load %arg3[%c0_17, %c0_18] : memref<2x32xf32, #tpu.memory_space<vmem>>, vector<2x32xf32>
      tpu.vector_store %arg3[%c0_17, %c0_18], %22 {strides = array<i32>} : memref<2x32xf32, #tpu.memory_space<vmem>>, vector<2x32xf32>,
      %c0_19 = arith.constant 0 : index
      %c0_20 = arith.constant 0 : index
      %24 = vector.load %arg6[%c0_19, %c0_20] : memref<2x32xf32, #tpu.memory_space<vmem>>, vector<2x32xf32>
      %c0_21 = arith.constant 0 : index
      %c0_22 = arith.constant 0 : index
      %25 = vector.load %arg4[%c0_21, %c0_22] : memref<2x32xf32, #tpu.memory_space<vmem>>, vector<2x32xf32>
      tpu.vector_store %arg4[%c0_21, %c0_22], %24 {strides = array<i32>} : memref<2x32xf32, #tpu.memory_space<vmem>>, vector<2x32xf32>,
    } else {
    }
    return
  }
  func.func @transform_0(%arg0: i32) -> (i32, i32) {
    %c0_i32 = arith.constant 0 : i32
    %c0_i32_0 = arith.constant 0 : i32
    return %c0_i32, %arg0 : i32, i32
  }
  func.func @transform_1(%arg0: i32) -> (i32, i32) {
    %c0_i32 = arith.constant 0 : i32
    %c0_i32_0 = arith.constant 0 : i32
    return %arg0, %c0_i32 : i32, i32
  }
  func.func @transform_2(%arg0: i32) -> (i32, i32) {
    %c0_i32 = arith.constant 0 : i32
    %c0_i32_0 = arith.constant 0 : i32
    %c0_i32_1 = arith.constant 0 : i32
    return %c0_i32, %c0_i32_0 : i32, i32
  }
  func.func @transform_3(%arg0: i32) -> (i32, i32) {
    %c0_i32 = arith.constant 0 : i32
    %c0_i32_0 = arith.constant 0 : i32
    %c0_i32_1 = arith.constant 0 : i32
    return %c0_i32, %c0_i32_0 : i32, i32
  }
}

</mosaic_0001>

<llo_original>
// kernel: tpu_custom_call.1
$region0: #{tpu_custom_call.1}
  #allocation0 [shape = 'u32[]', space=smem, size = 0x4, offset = 0x4, fixed_abs, tag = 'smem constant byte address 0x4 - core index']
  #allocation1 [shape = 'u32[144,128]{1,0:T(1,128)}', space=vmem, size = 0x12000, scoped, tag = 'internal scratch']
  #allocation2 [shape = 'f32[2,32]{1,0:T(2,128)}', space=vmem, size = 0x400, scoped, tag = 'scratch operand']
  #allocation3 [shape = 'f32[2,32]{1,0:T(2,128)}', space=vmem, size = 0x400, scoped, tag = 'scratch operand']
  %s0 = inlined_call_operand.hbm [shape: s32[1,8], index: 0, kind: input, shape index: {}]
  %s1 = inlined_call_operand.hbm [shape: f32[8,32], index: 1, kind: input, shape index: {}]
  %s2 = inlined_call_operand.hbm [shape: f32[2,32], index: 2, kind: output, shape index: {0}]
  %s3 = inlined_call_operand.hbm [shape: f32[2,32], index: 3, kind: output, shape index: {1}]
  %4 = xla_tuple %s2, %s3
  %s5 = sld [smem:[#allocation0]]
  $region42: #{tpu_custom_call.1} parent=0
    _
  %s7 = ssub.s32 1, %s5
  %s8 = scalar_select 0, %s7, %s5
  $region1: #{tpu_custom_call.1} parent=0
    #allocation4 [shape = 'u8[512]{0}', space=vmem, size = 0x400, scoped, tag = 'input window, operand 0, single buffered']
    #allocation5 [shape = 's32[1]{0}', space=sflag, size = 0x4, scoped, tag = 'scoped memory for tpu_custom_call.1']
    #allocation6 [shape = 's32[1]{0}', space=sflag, size = 0x4, scoped, tag = 'scoped memory for tpu_custom_call.1']
    #allocation7 [shape = 'u8[4096]{0}', space=vmem, size = 0x1000, scoped, tag = 'input window, operand 1, single buffered']
    #allocation8 [shape = 's32[1]{0}', space=sflag, size = 0x4, scoped, tag = 'scoped memory for tpu_custom_call.1']
    #allocation9 [shape = 'u8[1024]{0}', space=vmem, size = 0x400, scoped, tag = 'output window, operand 0, single buffered']
    #allocation10 [shape = 'u8[1024]{0}', space=vmem, size = 0x400, scoped, tag = 'output window, operand 1, single buffered']
    #allocation11 [shape = 's32[1]{0}', space=sflag, size = 0x4, scoped, tag = 'scoped memory for tpu_custom_call.1']
    %9 = vsyncpa [#allocation5], 0
    %10 = vsyncpa [#allocation8], 0
    %11 = vsyncpa [#allocation6], 0
    %12 = vsyncpa [#allocation11], 0
    // Predicated region
    $region2: #{tpu_custom_call.1} parent=1 // pred_check
      _
    $region3: #{tpu_custom_call.1} parent=1 // pred_check_branch
      %14 = sbr.rel (0) target = $region5
    $region4: #{tpu_custom_call.1} parent=1 // pred_region
      %s16 = ssub.s32 16, 16
      %17 = vsyncadd [#allocation5], %s16
      %s19 = sshll.u32 [#allocation4], 4
      %s20 = int_to_ptr.vmem [resolvable:$true] %s19
      %22 = dma.hbm_to_vmem [thread:$0]  %s0, 16, %s20, [#allocation5]
    $region5: #{tpu_custom_call.1} parent=1 // pred_fallthru
      _
    // Predicated region
    $region6: #{tpu_custom_call.1} parent=1 // pred_check
      _
    $region7: #{tpu_custom_call.1} parent=1 // pred_check_branch
      %24 = sbr.rel (0) target = $region9
    $region8: #{tpu_custom_call.1} parent=1 // pred_region
      %s26 = ssub.s32 128, 128
      %27 = vsyncadd [#allocation8], %s26
      %s29 = sshll.u32 [#allocation7], 4
      %s30 = int_to_ptr.vmem [resolvable:$true] %s29
      %32 = dma.hbm_to_vmem [thread:$0]  %s1, 128, %s30, [#allocation8]
    $region9: #{tpu_custom_call.1} parent=1 // pred_fallthru
      _
    // Predicated region
    $region10: #{tpu_custom_call.1} parent=1 // pred_check
      _
    $region11: #{tpu_custom_call.1} parent=1 // pred_check_branch
      %34 = sbr.rel (0) target = $region13
    $region12: #{tpu_custom_call.1} parent=1 // pred_region
      %35 = dma.done [#allocation5], 16
    $region13: #{tpu_custom_call.1} parent=1 // pred_fallthru
      _
    // Predicated region
    $region14: #{tpu_custom_call.1} parent=1 // pred_check
      _
    $region15: #{tpu_custom_call.1} parent=1 // pred_check_branch
      %37 = sbr.rel (0) target = $region17
    $region16: #{tpu_custom_call.1} parent=1 // pred_region
      %38 = dma.done [#allocation8], 128
    $region17: #{tpu_custom_call.1} parent=1 // pred_fallthru
      _
    %p39 = scmp.eq.s32.totalorder 0, 0
    // Predicated region
    $region18: #{tpu_custom_call.1} parent=1 // pred_check
      %p40 = pneg %p39
    $region19: #{tpu_custom_call.1} parent=1 // pred_check_branch
      %42 = sbr.rel (%p40) target = $region21
    $region20: #{tpu_custom_call.1} parent=1 // pred_region
      %vm43 = vcmask 254976
      %44 = vst.msk [vmem:[#allocation2] sm:$0x3] %vm43, 0.0
      %45 = vst.msk [vmem:[#allocation3] sm:$0x3] %vm43, 0.0
    $region21: #{tpu_custom_call.1} parent=1 // pred_fallthru
      _
    %v46 = vld [vmem:[#allocation7] sm:$0xff]
    %v47 = vld [vmem:[#allocation4] sm:$0x1]
    %v48 = vlaneseq
    %v49 = vshrl.u32 %v48, 7
    %v50 = vlaneseq
    %v51 = vshrl.u32 %v50, 7
    %v52 = vsub.s32 0, %v51
    %v53 = vrot.slane %v47, %v52
    %vm54 = vcmp.eq.s32.totalorder %v53, %v49
    %v55 = vsel %vm54, 1, 0
    %v56 = vcvt.s32.f32 %v55
    %v57 = vld [vmem:[#allocation2] sm:$0x3]
    %vm58 = vcmask 64512
    %v60 = vsel %vm58, %v56, 0
    %62 = vmatprep.subr.mxu0 0.0
    %63 = vmatpush1.msra.mxu0 %v46
    %64 = vmatprep.subr.mxu0 0.0
    %65 = vmatpush1.msra.mxu0 0.0
    %66 = vmatprep.subr.mxu0 0.0
    %67 = vmatpush1.msra.mxu0 0.0
    %68 = vmatprep.subr.mxu0 0.0
    %69 = vmatpush1.msra.mxu0 0.0
    %70 = vmatprep.subr.mxu0 0.0
    %71 = vmatpush1.msra.mxu0 0.0
    %72 = vmatprep.subr.mxu0 0.0
    %73 = vmatpush1.msra.mxu0 0.0
    %74 = vmatprep.subr.mxu0 0.0
    %75 = vmatpush1.msra.mxu0 0.0
    %76 = vmatprep.subr.mxu0 0.0
    %77 = vmatpush1.msra.mxu0 0.0
    %78 = vmatprep.subr.mxu0 0.0
    %79 = vmatpush1.msra.mxu0 0.0
    %80 = vmatprep.subr.mxu0 0.0
    %81 = vmatpush1.msra.mxu0 0.0
    %82 = vmatprep.subr.mxu0 0.0
    %83 = vmatpush1.msra.mxu0 0.0
    %84 = vmatprep.subr.mxu0 0.0
    %85 = vmatpush1.msra.mxu0 0.0
    %86 = vmatprep.subr.mxu0 0.0
    %87 = vmatpush1.msra.mxu0 0.0
    %88 = vmatprep.subr.mxu0 0.0
    %89 = vmatpush1.msra.mxu0 0.0
    %90 = vmatprep.subr.mxu0 0.0
    %91 = vmatpush1.msra.mxu0 0.0
    %92 = vmatprep.subr.mxu0 0.0
    %93 = vmatpush1.msra.mxu0 0.0
    %94 = vmatprep.subr.mxu0 0.0
    %95 = vmatpush1.msra.mxu0 0.0
    %96 = vmatprep.subr.mxu0 0.0
    %97 = vmatpush1.msra.mxu0 0.0
    %98 = vmatprep.subr.mxu0 0.0
    %99 = vmatpush1.msra.mxu0 0.0
    %100 = vmatprep.subr.mxu0 0.0
    %101 = vmatpush1.msra.mxu0 0.0
    %102 = vmatprep.subr.mxu0 0.0
    %103 = vmatpush1.msra.mxu0 0.0
    %104 = vmatprep.subr.mxu0 0.0
    %105 = vmatpush1.msra.mxu0 0.0
    %106 = vmatprep.subr.mxu0 0.0
    %107 = vmatpush1.msra.mxu0 0.0
    %108 = vmatprep.subr.mxu0 0.0
    %109 = vmatpush1.msra.mxu0 0.0
    %110 = vmatprep.subr.mxu0 0.0
    %111 = vmatpush1.msra.mxu0 0.0
    %112 = vmatprep.subr.mxu0 0.0
    %113 = vmatpush1.msra.mxu0 0.0
    %114 = vmatprep.subr.mxu0 0.0
    %115 = vmatpush1.msra.mxu0 0.0
    %116 = vmatprep.subr.mxu0 0.0
    %117 = vmatpush1.msra.mxu0 0.0
    %118 = vmatprep.subr.mxu0 0.0
    %119 = vmatpush1.msra.mxu0 0.0
    %120 = vmatprep.subr.mxu0 0.0
    %121 = vmatpush1.msra.mxu0 0.0
    %122 = vmatprep.subr.mxu0 0.0
    %123 = vmatpush1.msra.mxu0 0.0
    %124 = vmatprep.subr.mxu0 0.0
    %125 = vmatpush1.msra.mxu0 0.0
    %126 = vmatprep.mubr.f32.mxu0 0.0
    %127 = vmatmul.mubr.f32.gmra.mrb[0].mxu0 %v60
    %v128 = vpop.f32.mrb[0].mxu0
    %v129 = vadd.f32 0.0, %v128
    %v130 = vpop.f32.mrb[0].mxu0
    %131 = vdwg.mxu0
    %v132 = vadd.f32 %v57, %v129
    %vm133 = vcmask 254976
    %134 = vst.msk [vmem:[#allocation2] sm:$0x3] %vm133, %v132
    %v135 = vld [vmem:[#allocation3] sm:$0x3]
    %v136 = vmul.f32 %v46, %v46
    %137 = vmatprep.subr.mxu0 0.0
    %138 = vmatpush1.msra.mxu0 %v136
    %139 = vmatprep.subr.mxu0 0.0
    %140 = vmatpush1.msra.mxu0 0.0
    %141 = vmatprep.subr.mxu0 0.0
    %142 = vmatpush1.msra.mxu0 0.0
    %143 = vmatprep.subr.mxu0 0.0
    %144 = vmatpush1.msra.mxu0 0.0
    %145 = vmatprep.subr.mxu0 0.0
    %146 = vmatpush1.msra.mxu0 0.0
    %147 = vmatprep.subr.mxu0 0.0
    %148 = vmatpush1.msra.mxu0 0.0
    %149 = vmatprep.subr.mxu0 0.0
    %150 = vmatpush1.msra.mxu0 0.0
    %151 = vmatprep.subr.mxu0 0.0
    %152 = vmatpush1.msra.mxu0 0.0
    %153 = vmatprep.subr.mxu0 0.0
    %154 = vmatpush1.msra.mxu0 0.0
    %155 = vmatprep.subr.mxu0 0.0
    %156 = vmatpush1.msra.mxu0 0.0
    %157 = vmatprep.subr.mxu0 0.0
    %158 = vmatpush1.msra.mxu0 0.0
    %159 = vmatprep.subr.mxu0 0.0
    %160 = vmatpush1.msra.mxu0 0.0
    %161 = vmatprep.subr.mxu0 0.0
    %162 = vmatpush1.msra.mxu0 0.0
    %163 = vmatprep.subr.mxu0 0.0
    %164 = vmatpush1.msra.mxu0 0.0
    %165 = vmatprep.subr.mxu0 0.0
    %166 = vmatpush1.msra.mxu0 0.0
    %167 = vmatprep.subr.mxu0 0.0
    %168 = vmatpush1.msra.mxu0 0.0
    %169 = vmatprep.subr.mxu0 0.0
    %170 = vmatpush1.msra.mxu0 0.0
    %171 = vmatprep.subr.mxu0 0.0
    %172 = vmatpush1.msra.mxu0 0.0
    %173 = vmatprep.subr.mxu0 0.0
    %174 = vmatpush1.msra.mxu0 0.0
    %175 = vmatprep.subr.mxu0 0.0
    %176 = vmatpush1.msra.mxu0 0.0
    %177 = vmatprep.subr.mxu0 0.0
    %178 = vmatpush1.msra.mxu0 0.0
    %179 = vmatprep.subr.mxu0 0.0
    %180 = vmatpush1.msra.mxu0 0.0
    %181 = vmatprep.subr.mxu0 0.0
    %182 = vmatpush1.msra.mxu0 0.0
    %183 = vmatprep.subr.mxu0 0.0
    %184 = vmatpush1.msra.mxu0 0.0
    %185 = vmatprep.subr.mxu0 0.0
    %186 = vmatpush1.msra.mxu0 0.0
    %187 = vmatprep.subr.mxu0 0.0
    %188 = vmatpush1.msra.mxu0 0.0
    %189 = vmatprep.subr.mxu0 0.0
    %190 = vmatpush1.msra.mxu0 0.0
    %191 = vmatprep.subr.mxu0 0.0
    %192 = vmatpush1.msra.mxu0 0.0
    %193 = vmatprep.subr.mxu0 0.0
    %194 = vmatpush1.msra.mxu0 0.0
    %195 = vmatprep.subr.mxu0 0.0
    %196 = vmatpush1.msra.mxu0 0.0
    %197 = vmatprep.subr.mxu0 0.0
    %198 = vmatpush1.msra.mxu0 0.0
    %199 = vmatprep.subr.mxu0 0.0
    %200 = vmatpush1.msra.mxu0 0.0
    %201 = vmatprep.mubr.f32.mxu0 0.0
    %202 = vmatmul.mubr.f32.gmra.mrb[0].mxu0 %v60
    %v203 = vpop.f32.mrb[0].mxu0
    %v204 = vadd.f32 0.0, %v203
    %v205 = vpop.f32.mrb[0].mxu0
    %206 = vdwg.mxu0
    %v207 = vadd.f32 %v135, %v204
    %208 = vst.msk [vmem:[#allocation3] sm:$0x3] %vm133, %v207
    // Predicated region
    $region22: #{tpu_custom_call.1} parent=1 // pred_check
      %p209 = pneg %p39
    $region23: #{tpu_custom_call.1} parent=1 // pred_check_branch
      %211 = sbr.rel (%p209) target = $region25
    $region24: #{tpu_custom_call.1} parent=1 // pred_region
      %v212 = vld [vmem:[#allocation2] sm:$0x3]
      %213 = vst.msk [vmem:[#allocation9] sm:$0x3] %vm133, %v212
      %v214 = vld [vmem:[#allocation3] sm:$0x3]
      %215 = vst.msk [vmem:[#allocation10] sm:$0x3] %vm133, %v214
    $region25: #{tpu_custom_call.1} parent=1 // pred_fallthru
      _
    // Predicated region
    $region26: #{tpu_custom_call.1} parent=1 // pred_check
      _
    $region27: #{tpu_custom_call.1} parent=1 // pred_check_branch
      %217 = sbr.rel (0) target = $region29
    $region28: #{tpu_custom_call.1} parent=1 // pred_region
      %s219 = ssub.s32 32, 32
      %220 = vsyncadd [#allocation6], %s219
      %s222 = sshll.u32 [#allocation9], 4
      %s223 = int_to_ptr.vmem [resolvable:$true] %s222
      %225 = dma.vmem_to_hbm [thread:$0]  %s223, 32, %s2, [#allocation6]
    $region29: #{tpu_custom_call.1} parent=1 // pred_fallthru
      _
    // Predicated region
    $region30: #{tpu_custom_call.1} parent=1 // pred_check
      _
    $region31: #{tpu_custom_call.1} parent=1 // pred_check_branch
      %227 = sbr.rel (0) target = $region33
    $region32: #{tpu_custom_call.1} parent=1 // pred_region
      %s229 = ssub.s32 32, 32
      %230 = vsyncadd [#allocation11], %s229
      %s232 = sshll.u32 [#allocation10], 4
      %s233 = int_to_ptr.vmem [resolvable:$true] %s232
      %235 = dma.vmem_to_hbm [thread:$0]  %s233, 32, %s3, [#allocation11]
    $region33: #{tpu_custom_call.1} parent=1 // pred_fallthru
      _
    // Predicated region
    $region34: #{tpu_custom_call.1} parent=1 // pred_check
      _
    $region35: #{tpu_custom_call.1} parent=1 // pred_check_branch
      %237 = sbr.rel (0) target = $region37
    $region36: #{tpu_custom_call.1} parent=1 // pred_region
      %238 = dma.done [#allocation6], 32
    $region37: #{tpu_custom_call.1} parent=1 // pred_fallthru
      _
    // Predicated region
    $region38: #{tpu_custom_call.1} parent=1 // pred_check
      _
    $region39: #{tpu_custom_call.1} parent=1 // pred_check_branch
      %240 = sbr.rel (0) target = $region41
    $region40: #{tpu_custom_call.1} parent=1 // pred_region
      %241 = dma.done [#allocation11], 32
    $region41: #{tpu_custom_call.1} parent=1 // pred_fallthru
      _
    %242 = vsyncpa [#allocation5], 1
    %243 = vsyncpa [#allocation8], 1
    %244 = vsyncpa [#allocation6], 1
    %245 = vsyncpa [#allocation11], 1

</llo_original>
